<compile_context>
chip_gen: v7x
topology: tpu7x:2x2x1
jax: 0.10.0
libtpu: 0.0.40
codegen_flags: <defaults>
</compile_context>

<pallas_src>
import functools
import math

import jax
import jax.numpy as jnp
from jax import lax
from jax.experimental import pallas as pl
from jax.experimental.pallas import tpu as pltpu


_ONEHOT_MAX_VOCAB = 2048          # one-hot/MXU gather only for small tables
_MAX_PREFETCH_TOKENS = 1 << 16    # bounds SMEM used by scalar-prefetched ids


def _round_up(x, m):
    return (x + m - 1) // m * m


def _vmem_capacity_bytes():
    """Physical VMEM per TensorCore (128 MiB v5e/v6e, 64 MiB v7x)."""
    try:
        cap = int(pltpu.get_tpu_info().vmem_capacity_bytes)
        if cap > 0:
            return cap
    except Exception:
        pass
    return 64 << 20   # conservative default = v7x per-core VMEM


def _table_spec(vocab, d_model, index_map, single_buffer):
    # Resident table: whole array as one block with a constant index map, so it
    # is DMA'd once and reused by every grid step.  pl.Buffered(1) single-
    # buffers it (it is never re-fetched), halving its VMEM footprint vs. the
    # default double buffering -- most valuable on v7x's 64 MiB VMEM.
    kwargs = {}
    if single_buffer and hasattr(pl, "Buffered"):
        kwargs["pipeline_mode"] = pl.Buffered(1)
    return pl.BlockSpec((vocab, d_model), index_map, **kwargs)


# ---------------------------------------------------------------------------
# Path A: one-hot gather on the MXU (small vocab, VMEM-resident table).
# ---------------------------------------------------------------------------
def _embed_onehot_kernel(ids_ref, w_ref, out_ref, *, scale, vocab):
    # ids_ref: (tm, 1) int32 VMEM tile of token ids for this grid step.
    # w_ref:   (vocab, d_model) VMEM-resident table.
    # out_ref: (tm, d_model) output tile -> single dense store.
    ids = ids_ref[...]                                                # (tm, 1)
    cols = lax.broadcasted_iota(jnp.int32, (ids.shape[0], vocab), 1)
    w = w_ref[...]
    oh_dtype = jnp.float32 if w.dtype == jnp.float32 else w.dtype
    # sqrt(d_model) is folded into the one-hot values: the scale multiply rides
    # the MXU for free instead of a per-element VPU pass over the output.
    onehot = jnp.where(cols == ids,
                       jnp.asarray(scale, oh_dtype),
                       jnp.asarray(0, oh_dtype))
    out_ref[...] = jnp.dot(
        onehot, w, preferred_element_type=jnp.float32).astype(out_ref.dtype)


def _embed_onehot_call(ids, weight, scale, *, tm, cap):
    vocab, d_model = weight.shape
    n = ids.shape[0]
    n_pad = _round_up(n, tm)
    if n_pad != n:
        ids = jnp.pad(ids, (0, n_pad - n))    # pad id 0 (valid row, sliced off)
    ids2d = ids.reshape(n_pad, 1)
    itemsize = jnp.dtype(weight.dtype).itemsize
    table_bytes = vocab * d_model * itemsize
    out_tile_bytes = tm * d_model * itemsize
    cost = pl.CostEstimate(
        flops=2 * n_pad * vocab * d_model,
        transcendentals=0,
        bytes_accessed=table_bytes + n_pad * d_model * itemsize + n_pad * 4,
    )
    kernel = functools.partial(_embed_onehot_kernel, scale=scale, vocab=vocab)

    def run(single_buffer):
        table_mult = 1 if single_buffer else 2
        need = (table_mult * table_bytes + 2 * out_tile_bytes
                + tm * vocab * 4 + 2 * tm * 4 + (4 << 20))
        vmem_limit = int(min(max(need, 32 << 20), int(cap * 0.85)))
        return pl.pallas_call(
            kernel,
            out_shape=jax.ShapeDtypeStruct((n_pad, d_model), weight.dtype),
            grid=(n_pad // tm,),
            in_specs=[
                pl.BlockSpec((tm, 1), lambda i: (i, 0)),
                _table_spec(vocab, d_model, lambda i: (0, 0), single_buffer),
            ],
            out_specs=pl.BlockSpec((tm, d_model), lambda i: (i, 0)),
            compiler_params=pltpu.CompilerParams(
                dimension_semantics=("parallel",),   # 2 TCs on v7x
                vmem_limit_bytes=vmem_limit,
            ),
            cost_estimate=cost,
        )(ids2d, weight)

    try:
        out = run(True)
    except Exception:
        # pl.Buffered(1) rejected by this build -> default double buffering.
        out = run(False)
    return out[:n]


# ---------------------------------------------------------------------------
# Path B: VMEM-resident table, scalar row gather assembled into dense
# sublane-group stores (8 rows f32 / 16 rows bf16 per unmasked store).
# ---------------------------------------------------------------------------
def _embed_gather_kernel(ids_ref, w_ref, out_ref, *, scale, tm, group, unroll):
    # ids_ref: (n_pad,) int32 ids in SMEM (scalar prefetch).
    # w_ref:   (vocab, d_model) VMEM-resident table.
    # out_ref: (tm, d_model) output tile.
    base = pl.program_id(0) * tm

    def do_group(g, carry):
        start = pl.multiple_of(g * group, group)
        rows = [w_ref[pl.ds(ids_ref[base + start + r], 1), :]
                for r in range(group)]
        block = jnp.concatenate(rows, axis=0).astype(jnp.float32) * scale
        out_ref[pl.ds(start, group), :] = block.astype(out_ref.dtype)
        return carry

    lax.fori_loop(0, tm // group, do_group, 0, unroll=unroll)


def _embed_vmem_gather_call(ids, weight, scale, *, tm, group, cap):
    vocab, d_model = weight.shape
    n = ids.shape[0]
    n_pad = _round_up(n, tm)
    if n_pad != n:
        ids = jnp.pad(ids, (0, n_pad - n))
    itemsize = jnp.dtype(weight.dtype).itemsize
    table_bytes = vocab * d_model * itemsize
    out_tile_bytes = tm * d_model * itemsize
    # Cap the unroll by vreg pressure: each in-flight row holds ceil(d/128) vregs.
    lanes = max(1, -(-d_model // 128))
    unroll = max(1, min(4, 32 // (group * lanes)))
    cost = pl.CostEstimate(
        flops=n_pad * d_model,
        transcendentals=0,
        bytes_accessed=table_bytes + n_pad * d_model * itemsize + n_pad * 4,
    )
    kernel = functools.partial(_embed_gather_kernel, scale=scale, tm=tm,
                               group=group, unroll=unroll)

    def run(single_buffer):
        table_mult = 1 if single_buffer else 2
        need = table_mult * table_bytes + 2 * out_tile_bytes + (4 << 20)
        vmem_limit = int(min(max(need, 32 << 20), int(cap * 0.85)))
        return pl.pallas_call(
            kernel,
            out_shape=jax.ShapeDtypeStruct((n_pad, d_model), weight.dtype),
            grid_spec=pltpu.PrefetchScalarGridSpec(
                num_scalar_prefetch=1,
                grid=(n_pad // tm,),
                in_specs=[_table_spec(vocab, d_model,
                                      lambda i, ids_s: (0, 0), single_buffer)],
                out_specs=pl.BlockSpec((tm, d_model), lambda i, ids_s: (i, 0)),
            ),
            compiler_params=pltpu.CompilerParams(
                dimension_semantics=("parallel",),
                vmem_limit_bytes=vmem_limit,
            ),
            cost_estimate=cost,
        )(ids, weight)

    try:
        out = run(True)
    except Exception:
        out = run(False)
    return out[:n]


# ---------------------------------------------------------------------------
# Path C: table too large for VMEM -- manual-DMA row gather from HBM with up
# to 8 outstanding copies into a VMEM slab, then one dense scaled store.
# ---------------------------------------------------------------------------
def _embed_hbm_kernel(ids_ref, w_hbm, out_ref, slab, sem, *, scale, tm, nslots):
    # ids_ref: (n_pad,) int32 ids in SMEM (scalar prefetch).
    # w_hbm:   (vocab, d_model) table left in HBM (memory_space=pl.ANY).
    # out_ref: (tm, d_model) output tile.
    # slab:    (tm, d_model) VMEM gather buffer; sem: (nslots,) DMA semaphores.
    base = pl.program_id(0) * tm

    def issue(r, slot):
        tok = ids_ref[base + r]
        pltpu.make_async_copy(w_hbm.at[pl.ds(tok, 1), :],
                              slab.at[pl.ds(r, 1), :],
                              sem.at[slot]).start()

    for s in range(nslots):                 # prime nslots outstanding gathers
        issue(s, s)

    @pl.loop(0, tm)
    def _(r):
        slot = r & (nslots - 1)
        pltpu.make_async_copy(w_hbm.at[pl.ds(0, 1), :],
                              slab.at[pl.ds(r, 1), :],
                              sem.at[slot]).wait()

        @pl.when(r + nslots < tm)
        def _issue_next():
            issue(r + nslots, slot)

    out_ref[...] = (slab[...].astype(jnp.float32) * scale).astype(out_ref.dtype)


def _embed_hbm_gather_call(ids, weight, scale, *, tm, cap):
    vocab, d_model = weight.shape
    n = ids.shape[0]
    n_pad = _round_up(n, tm)
    if n_pad != n:
        ids = jnp.pad(ids, (0, n_pad - n))
    itemsize = jnp.dtype(weight.dtype).itemsize
    nslots = 8                               # outstanding row DMAs (power of 2)
    out_tile_bytes = tm * d_model * itemsize
    need = 3 * out_tile_bytes + (4 << 20)
    vmem_limit = int(min(max(need, 32 << 20), int(cap * 0.85)))
    cost = pl.CostEstimate(
        flops=n_pad * d_model,
        transcendentals=0,
        bytes_accessed=2 * n_pad * d_model * itemsize + n_pad * 4,
    )
    kernel = functools.partial(_embed_hbm_kernel, scale=scale, tm=tm,
                               nslots=nslots)
    out = pl.pallas_call(
        kernel,
        out_shape=jax.ShapeDtypeStruct((n_pad, d_model), weight.dtype),
        grid_spec=pltpu.PrefetchScalarGridSpec(
            num_scalar_prefetch=1,
            grid=(n_pad // tm,),
            in_specs=[pl.BlockSpec(memory_space=pl.ANY)],
            out_specs=pl.BlockSpec((tm, d_model), lambda i, ids_s: (i, 0)),
            scratch_shapes=[
                pltpu.VMEM((tm, d_model), weight.dtype),
                pltpu.SemaphoreType.DMA((nslots,)),
            ],
        ),
        compiler_params=pltpu.CompilerParams(
            dimension_semantics=("parallel",),
            vmem_limit_bytes=vmem_limit,
        ),
        cost_estimate=cost,
    )(ids, weight)
    return out[:n]


# ---------------------------------------------------------------------------
# Path selection + public wrapper.
# ---------------------------------------------------------------------------
def _chunked(ids, fn):
    # Bound the SMEM used by the scalar-prefetched id vector (1D SMEM arrays
    # pad to next_pow2(4N) bytes) by chunking very long token streams.
    n = ids.shape[0]
    if n <= _MAX_PREFETCH_TOKENS:
        return fn(ids)
    outs = [fn(ids[s:s + _MAX_PREFETCH_TOKENS])
            for s in range(0, n, _MAX_PREFETCH_TOKENS)]
    return jnp.concatenate(outs, axis=0)


def _embed_tokens(ids, weight, scale):
    n = ids.shape[0]
    vocab, d_model = weight.shape
    itemsize = jnp.dtype(weight.dtype).itemsize
    group = max(8, 32 // itemsize)          # sublane group: 8 f32 / 16 bf16 / 32 i8
    row_bytes = d_model * itemsize

    cap = _vmem_capacity_bytes()
    budget = int(cap * 0.70)                # ~90 MiB on v5e/v6e, ~45 MiB on v7x

    # Adaptive token tile: target ~0.5 MiB dense output tiles (HBM-stream
    # friendly), clamp to [group, 2048], never (much) larger than the input.
    tm = _round_up(max((512 * 1024) // row_bytes, 1), group)
    tm = max(group, min(tm, 2048))
    tm = min(tm, _round_up(n, group))

    table_bytes = vocab * d_model * itemsize
    fits_vmem = table_bytes + 2 * tm * row_bytes + (2 << 20) <= budget

    if fits_vmem and vocab <= _ONEHOT_MAX_VOCAB:
        # Keep the in-kernel (tm, vocab) one-hot temporary modest (<= ~4 MiB).
        tm_oh = max(group, ((4 << 20) // (vocab * 4)) // group * group)
        tm = min(tm, tm_oh)
        return _embed_onehot_call(ids, weight, scale, tm=tm, cap=cap)
    if fits_vmem:
        return _chunked(ids, lambda c: _embed_vmem_gather_call(
            c, weight, scale, tm=tm, group=group, cap=cap))
    # TODO(synk): intermediate path that chunks d_model into column slabs
    # fitting the per-generation VMEM budget (keeps table-read-once behavior)
    # before falling all the way back to per-row HBM gathers.
    # TODO(synk): fold k = 128 // d_model tokens into the lane dimension when
    # d_model < 128 so toy configs also get fully lane-dense output stores.
    return _chunked(ids, lambda c: _embed_hbm_gather_call(
        c, weight, scale, tm=tm, cap=cap))


def embeddings_forward(x_ids, weight):
    """Pallas equivalent of Embeddings.forward: weight[x_ids] * sqrt(d_model)."""
    vocab, d_model = weight.shape
    lead_shape = x_ids.shape
    n = math.prod(lead_shape)
    scale = math.sqrt(d_model)
    # Clamp ids defensively (nn.Embedding would raise on out-of-range ids;
    # documented precondition: ids must already be in [0, vocab)).
    ids = jnp.clip(x_ids.reshape(n).astype(jnp.int32), 0, vocab - 1)
    out = _embed_tokens(ids, weight, scale)
    return out.reshape(*lead_shape, d_model)


if __name__ == "__main__":
    key = jax.random.PRNGKey(0)

    def run_case(name, key, *, d_model, vocab, batch, seq, tol):
        k_w, k_x, key = jax.random.split(key, 3)
        weight = jax.random.normal(k_w, (vocab, d_model), dtype=jnp.float32)
        x_ids = jax.random.randint(k_x, (batch, seq), 0, vocab, dtype=jnp.int32)
        out = jax.block_until_ready(embeddings_forward(x_ids, weight))
        ref = weight[x_ids] * math.sqrt(d_model)
        assert out.shape == (batch, seq, d_model), (name, out.shape)
        assert out.dtype == weight.dtype, (name, out.dtype)
        assert jnp.allclose(out, ref, atol=tol, rtol=tol), f"{name}: mismatch"
        return key

    # Config 1: tutorial toy setup (d_model=32, vocab=64) -> one-hot/MXU path.
    # (tol accounts for MXU f32 multi-pass precision on the one-hot matmul.)
    key = run_case("cfg1", key, d_model=32, vocab=64, batch=2, seq=8, tol=1e-4)
    # Config 2: multiple token tiles + padding, lane-dense d_model -> one-hot path.
    key = run_case("cfg2", key, d_model=128, vocab=1000, batch=4, seq=300,
                   tol=1e-4)
    # Config 3: vocab above the one-hot threshold -> VMEM-resident grouped
    # gather with dense sublane-group stores (exact f32 arithmetic).
    key = run_case("cfg3", key, d_model=256, vocab=4096, batch=6, seq=200,
                   tol=1e-6)

    print("KERNEL_OK")
</pallas_src>

<mosaic_0001>
module attributes {stable_mosaic.version = 11 : i64} {
  func.func @_embed_onehot_kernel(%arg0: i32, %arg1: memref<16x1xi32, #tpu.memory_space<vmem>>, %arg2: memref<64x32xf32, #tpu.memory_space<vmem>>, %arg3: memref<16x32xf32, #tpu.memory_space<vmem>>) attributes {dimension_semantics = [#tpu.dimension_semantics<parallel>], iteration_bounds = array<i64: 1>, scalar_prefetch = 0 : i64, scratch_operands = 0 : i64, tpu.core_type = #tpu.core_type<tc>, window_params = [{transform_indices = @transform_0, window_bounds = array<i64: 16, 1>}, {pipeline_mode = #tpu.pipeline_mode<synchronous>, transform_indices = @transform_1, window_bounds = array<i64: 64, 32>}, {transform_indices = @transform_2, window_bounds = array<i64: 16, 32>}]} {
    %c0 = arith.constant 0 : index
    %c0_0 = arith.constant 0 : index
    %0 = vector.load %arg1[%c0, %c0_0] : memref<16x1xi32, #tpu.memory_space<vmem>>, vector<16x1xi32>
    %1 = tpu.iota {dimensions = array<i32: 1>} : vector<16x64xi32>
    %c0_1 = arith.constant 0 : index
    %c0_2 = arith.constant 0 : index
    %2 = vector.load %arg2[%c0_1, %c0_2] : memref<64x32xf32, #tpu.memory_space<vmem>>, vector<64x32xf32>
    %3 = vector.broadcast %0 : vector<16x1xi32> to vector<16x64xi32>
    %4 = arith.cmpi eq, %1, %3 : vector<16x64xi32>
    %cst = arith.constant 5.65685415 : f32
    %cst_3 = arith.constant 0.000000e+00 : f32
    %5 = vector.broadcast %cst : f32 to vector<16x64xf32>
    %6 = vector.broadcast %cst_3 : f32 to vector<16x64xf32>
    %7 = arith.select %4, %5, %6 : vector<16x64xi1>, vector<16x64xf32>
    %cst_4 = arith.constant dense<0.000000e+00> : vector<16x32xf32>
    %8 = tpu.matmul %7, %2, %cst_4 {dimension_numbers = #tpu.dot_dimension_numbers<[1], [0], [0], [1], [0, 0, 1, 1], [], []>} : vector<16x64xf32>, vector<64x32xf32>, vector<16x32xf32> -> vector<16x32xf32>
    %c0_5 = arith.constant 0 : index
    %c0_6 = arith.constant 0 : index
    %9 = vector.load %arg3[%c0_5, %c0_6] : memref<16x32xf32, #tpu.memory_space<vmem>>, vector<16x32xf32>
    tpu.vector_store %arg3[%c0_5, %c0_6], %8 {strides = array<i32>} : memref<16x32xf32, #tpu.memory_space<vmem>>, vector<16x32xf32>,
    return
  }
  func.func @transform_0(%arg0: i32) -> (i32, i32) {
    %c0_i32 = arith.constant 0 : i32
    %c0_i32_0 = arith.constant 0 : i32
    return %arg0, %c0_i32 : i32, i32
  }
  func.func @transform_1(%arg0: i32) -> (i32, i32) {
    %c0_i32 = arith.constant 0 : i32
    %c0_i32_0 = arith.constant 0 : i32
    %c0_i32_1 = arith.constant 0 : i32
    return %c0_i32, %c0_i32_0 : i32, i32
  }
  func.func @transform_2(%arg0: i32) -> (i32, i32) {
    %c0_i32 = arith.constant 0 : i32
    %c0_i32_0 = arith.constant 0 : i32
    return %arg0, %c0_i32 : i32, i32
  }
}

module attributes {stable_mosaic.version = 11 : i64} {
  func.func @_embed_onehot_kernel(%arg0: i32, %arg1: memref<16x1xi32, #tpu.memory_space<vmem>>, %arg2: memref<64x32xf32, #tpu.memory_space<vmem>>, %arg3: memref<16x32xf32, #tpu.memory_space<vmem>>) attributes {dimension_semantics = [#tpu.dimension_semantics<parallel>], iteration_bounds = array<i64: 1>, scalar_prefetch = 0 : i64, scratch_operands = 0 : i64, tpu.core_type = #tpu.core_type<tc>, window_params = [{transform_indices = @transform_0, window_bounds = array<i64: 16, 1>}, {pipeline_mode = #tpu.pipeline_mode<synchronous>, transform_indices = @transform_1, window_bounds = array<i64: 64, 32>}, {transform_indices = @transform_2, window_bounds = array<i64: 16, 32>}]} {
    %c0 = arith.constant 0 : index
    %c0_0 = arith.constant 0 : index
    %0 = vector.load %arg1[%c0, %c0_0] : memref<16x1xi32, #tpu.memory_space<vmem>>, vector<16x1xi32>
    %1 = tpu.iota {dimensions = array<i32: 1>} : vector<16x64xi32>
    %c0_1 = arith.constant 0 : index
    %c0_2 = arith.constant 0 : index
    %2 = vector.load %arg2[%c0_1, %c0_2] : memref<64x32xf32, #tpu.memory_space<vmem>>, vector<64x32xf32>
    %3 = vector.broadcast %0 : vector<16x1xi32> to vector<16x64xi32>
    %4 = arith.cmpi eq, %1, %3 : vector<16x64xi32>
    %cst = arith.constant 5.65685415 : f32
    %cst_3 = arith.constant 0.000000e+00 : f32
    %5 = vector.broadcast %cst : f32 to vector<16x64xf32>
    %6 = vector.broadcast %cst_3 : f32 to vector<16x64xf32>
    %7 = arith.select %4, %5, %6 : vector<16x64xi1>, vector<16x64xf32>
    %cst_4 = arith.constant dense<0.000000e+00> : vector<16x32xf32>
    %8 = tpu.matmul %7, %2, %cst_4 {dimension_numbers = #tpu.dot_dimension_numbers<[1], [0], [0], [1], [0, 0, 1, 1], [], []>} : vector<16x64xf32>, vector<64x32xf32>, vector<16x32xf32> -> vector<16x32xf32>
    %c0_5 = arith.constant 0 : index
    %c0_6 = arith.constant 0 : index
    %9 = vector.load %arg3[%c0_5, %c0_6] : memref<16x32xf32, #tpu.memory_space<vmem>>, vector<16x32xf32>
    tpu.vector_store %arg3[%c0_5, %c0_6], %8 {strides = array<i32>} : memref<16x32xf32, #tpu.memory_space<vmem>>, vector<16x32xf32>,
    return
  }
  func.func @transform_0(%arg0: i32) -> (i32, i32) {
    %c0_i32 = arith.constant 0 : i32
    %c0_i32_0 = arith.constant 0 : i32
    return %arg0, %c0_i32 : i32, i32
  }
  func.func @transform_1(%arg0: i32) -> (i32, i32) {
    %c0_i32 = arith.constant 0 : i32
    %c0_i32_0 = arith.constant 0 : i32
    %c0_i32_1 = arith.constant 0 : i32
    return %c0_i32, %c0_i32_0 : i32, i32
  }
  func.func @transform_2(%arg0: i32) -> (i32, i32) {
    %c0_i32 = arith.constant 0 : i32
    %c0_i32_0 = arith.constant 0 : i32
    return %arg0, %c0_i32 : i32, i32
  }
}

</mosaic_0001>

<llo_original>
// kernel: tpu_custom_call.1
$region0: #{tpu_custom_call.1}
  #allocation0 [shape = 'u32[]', space=smem, size = 0x4, offset = 0x4, fixed_abs, tag = 'smem constant byte address 0x4 - core index']
  #allocation1 [shape = 'u32[144,128]{1,0:T(1,128)}', space=vmem, size = 0x12000, scoped, tag = 'internal scratch']
  %s0 = inlined_call_operand.vmem [shape: s32[16,1], index: 0, kind: input, shape index: {}]
  %s1 = inlined_call_operand.vmem [shape: f32[64,32], index: 1, kind: input, shape index: {}]
  %s2 = inlined_call_operand.hbm [shape: f32[16,32], index: 2, kind: output, shape index: {}]
  %s3 = sld [smem:[#allocation0]]
  $region18: #{tpu_custom_call.1} parent=0
    _
  %s5 = ssub.s32 1, %s3
  %s6 = scalar_select 0, %s5, %s3
  $region1: #{tpu_custom_call.1} parent=0
    #allocation2 [shape = 'u8[8192]{0}', space=vmem, size = 0x2000, scoped, tag = 'output window, operand 0, single buffered']
    #allocation3 [shape = 's32[1]{0}', space=sflag, size = 0x4, scoped, tag = 'scoped memory for tpu_custom_call.1']
    %7 = vsyncpa [#allocation3], 0
    // Predicated region
    $region2: #{tpu_custom_call.1} parent=1 // pred_check
      _
    $region3: #{tpu_custom_call.1} parent=1 // pred_check_branch
      %9 = sbr.rel (0) target = $region5
    $region4: #{tpu_custom_call.1} parent=1 // pred_region
      _
    $region5: #{tpu_custom_call.1} parent=1 // pred_fallthru
      _
    // Predicated region
    $region6: #{tpu_custom_call.1} parent=1 // pred_check
      _
    $region7: #{tpu_custom_call.1} parent=1 // pred_check_branch
      %11 = sbr.rel (0) target = $region9
    $region8: #{tpu_custom_call.1} parent=1 // pred_region
      _
    $region9: #{tpu_custom_call.1} parent=1 // pred_fallthru
      _
    %v12 = vld [vmem:[%s0] sm:$0xff]
    %v13 = vld [vmem:[%s0 + $0x8] sm:$0xff]
    %v14 = vlaneseq
    %v15 = vand.u32 %v14, 127
    %v16 = vld [vmem:[%s1] sm:$0xff]
    %v17 = vld [vmem:[%s1 + $0x8] sm:$0xff]
    %v18 = vld [vmem:[%s1 + $0x10] sm:$0xff]
    %v19 = vld [vmem:[%s1 + $0x18] sm:$0xff]
    %v20 = vld [vmem:[%s1 + $0x20] sm:$0xff]
    %v21 = vld [vmem:[%s1 + $0x28] sm:$0xff]
    %v22 = vld [vmem:[%s1 + $0x30] sm:$0xff]
    %v23 = vld [vmem:[%s1 + $0x38] sm:$0xff]
    %24 = vset.pattern.permute.xlu0 0
    %25 = vperm.xlu0 %24, %v12
    %v26 = vpop.permute.xlu0 %25
    %27 = vset.pattern.permute.xlu0 0
    %28 = vperm.xlu0 %27, %v13
    %v29 = vpop.permute.xlu0 %28
    %vm30 = vcmp.eq.s32.totalorder %v15, %v26
    %vm31 = vcmp.eq.s32.totalorder %v15, %v29
    %v32 = vsel %vm30, 5.656854, 0.0
    %v33 = vsel %vm31, 5.656854, 0.0
    %vm34 = vcmask 523264
    %v36 = vsel %vm34, %v32, 0
    %v39 = vsel %vm34, %v33, 0
    %41 = vmatprep.subr.mxu0 0.0
    %42 = vmatpush1.msra.mxu0 %v16
    %43 = vmatprep.subr.mxu0 0.0
    %44 = vmatpush1.msra.mxu0 %v17
    %45 = vmatprep.subr.mxu0 0.0
    %46 = vmatpush1.msra.mxu0 %v18
    %47 = vmatprep.subr.mxu0 0.0
    %48 = vmatpush1.msra.mxu0 %v19
    %49 = vmatprep.subr.mxu0 0.0
    %50 = vmatpush1.msra.mxu0 %v20
    %51 = vmatprep.subr.mxu0 0.0
    %52 = vmatpush1.msra.mxu0 %v21
    %53 = vmatprep.subr.mxu0 0.0
    %54 = vmatpush1.msra.mxu0 %v22
    %55 = vmatprep.subr.mxu0 0.0
    %56 = vmatpush1.msra.mxu0 %v23
    %57 = vmatprep.subr.mxu0 0.0
    %58 = vmatpush1.msra.mxu0 0.0
    %59 = vmatprep.subr.mxu0 0.0
    %60 = vmatpush1.msra.mxu0 0.0
    %61 = vmatprep.subr.mxu0 0.0
    %62 = vmatpush1.msra.mxu0 0.0
    %63 = vmatprep.subr.mxu0 0.0
    %64 = vmatpush1.msra.mxu0 0.0
    %65 = vmatprep.subr.mxu0 0.0
    %66 = vmatpush1.msra.mxu0 0.0
    %67 = vmatprep.subr.mxu0 0.0
    %68 = vmatpush1.msra.mxu0 0.0
    %69 = vmatprep.subr.mxu0 0.0
    %70 = vmatpush1.msra.mxu0 0.0
    %71 = vmatprep.subr.mxu0 0.0
    %72 = vmatpush1.msra.mxu0 0.0
    %73 = vmatprep.subr.mxu0 0.0
    %74 = vmatpush1.msra.mxu0 0.0
    %75 = vmatprep.subr.mxu0 0.0
    %76 = vmatpush1.msra.mxu0 0.0
    %77 = vmatprep.subr.mxu0 0.0
    %78 = vmatpush1.msra.mxu0 0.0
    %79 = vmatprep.subr.mxu0 0.0
    %80 = vmatpush1.msra.mxu0 0.0
    %81 = vmatprep.subr.mxu0 0.0
    %82 = vmatpush1.msra.mxu0 0.0
    %83 = vmatprep.subr.mxu0 0.0
    %84 = vmatpush1.msra.mxu0 0.0
    %85 = vmatprep.subr.mxu0 0.0
    %86 = vmatpush1.msra.mxu0 0.0
    %87 = vmatprep.subr.mxu0 0.0
    %88 = vmatpush1.msra.mxu0 0.0
    %89 = vmatprep.subr.mxu0 0.0
    %90 = vmatpush1.msra.mxu0 0.0
    %91 = vmatprep.subr.mxu0 0.0
    %92 = vmatpush1.msra.mxu0 0.0
    %93 = vmatprep.subr.mxu0 0.0
    %94 = vmatpush1.msra.mxu0 0.0
    %95 = vmatprep.subr.mxu0 0.0
    %96 = vmatpush1.msra.mxu0 0.0
    %97 = vmatprep.subr.mxu0 0.0
    %98 = vmatpush1.msra.mxu0 0.0
    %99 = vmatprep.subr.mxu0 0.0
    %100 = vmatpush1.msra.mxu0 0.0
    %101 = vmatprep.subr.mxu0 0.0
    %102 = vmatpush1.msra.mxu0 0.0
    %103 = vmatprep.subr.mxu0 0.0
    %104 = vmatpush1.msra.mxu0 0.0
    %105 = vmatprep.mubr.f32.mxu0 0.0
    %106 = vmatmul.mubr.f32.gmra.mrb[0].mxu0 %v36
    %v107 = vpop.f32.mrb[0].mxu0
    %v108 = vadd.f32 0.0, %v107
    %v109 = vpop.f32.mrb[0].mxu0
    %110 = vmatprep.mubr.f32.mxu0 0.0
    %111 = vmatmul.mubr.f32.gmra.mrb[0].mxu0 %v39
    %v112 = vpop.f32.mrb[0].mxu0
    %v113 = vadd.f32 0.0, %v112
    %v114 = vpop.f32.mrb[0].mxu0
    %115 = vdwg.mxu0
    %vm116 = vcmask 261120
    %117 = vst.msk [vmem:[#allocation2] sm:$0xff] %vm116, %v108
    %118 = vst.msk [vmem:[#allocation2 + $0x8] sm:$0xff] %vm116, %v113
    // Predicated region
    $region10: #{tpu_custom_call.1} parent=1 // pred_check
      _
    $region11: #{tpu_custom_call.1} parent=1 // pred_check_branch
      %120 = sbr.rel (0) target = $region13
    $region12: #{tpu_custom_call.1} parent=1 // pred_region
      %s122 = ssub.s32 256, 256
      %123 = vsyncadd [#allocation3], %s122
      %s124 = sshll.u32 [#allocation2], 4
      %s125 = int_to_ptr.vmem [resolvable:$true] %s124
      %130 = dma.vmem_to_hbm [thread:$0]  %s125, 256, %s2, [#allocation3], 128, 128, 8
    $region13: #{tpu_custom_call.1} parent=1 // pred_fallthru
      _
    // Predicated region
    $region14: #{tpu_custom_call.1} parent=1 // pred_check
      _
    $region15: #{tpu_custom_call.1} parent=1 // pred_check_branch
      %132 = sbr.rel (0) target = $region17
    $region16: #{tpu_custom_call.1} parent=1 // pred_region
      %133 = dma.done [#allocation3], 256
    $region17: #{tpu_custom_call.1} parent=1 // pred_fallthru
      _
    %134 = vsyncpa [#allocation3], 1

// kernel: tpu_custom_call.1
$region0: #{tpu_custom_call.1}
  #allocation0 [shape = 'u32[]', space=smem, size = 0x4, offset = 0x4, fixed_abs, tag = 'smem constant byte address 0x4 - core index']
  #allocation1 [shape = 'u32[144,128]{1,0:T(1,128)}', space=vmem, size = 0x12000, scoped, tag = 'internal scratch']
  %s0 = inlined_call_operand.vmem [shape: s32[16,1], index: 0, kind: input, shape index: {}]
  %s1 = inlined_call_operand.vmem [shape: f32[64,32], index: 1, kind: input, shape index: {}]
  %s2 = inlined_call_operand.hbm [shape: f32[16,32], index: 2, kind: output, shape index: {}]
  %s3 = sld [smem:[#allocation0]]
  $region18: #{tpu_custom_call.1} parent=0
    _
  %s5 = ssub.s32 1, %s3
  %s6 = scalar_select 0, %s5, %s3
  $region1: #{tpu_custom_call.1} parent=0
    #allocation2 [shape = 'u8[8192]{0}', space=vmem, size = 0x2000, scoped, tag = 'output window, operand 0, single buffered']
    #allocation3 [shape = 's32[1]{0}', space=sflag, size = 0x4, scoped, tag = 'scoped memory for tpu_custom_call.1']
    %7 = vsyncpa [#allocation3], 0
    // Predicated region
    $region2: #{tpu_custom_call.1} parent=1 // pred_check
      _
    $region3: #{tpu_custom_call.1} parent=1 // pred_check_branch
      %9 = sbr.rel (0) target = $region5
    $region4: #{tpu_custom_call.1} parent=1 // pred_region
      _
    $region5: #{tpu_custom_call.1} parent=1 // pred_fallthru
      _
    // Predicated region
    $region6: #{tpu_custom_call.1} parent=1 // pred_check
      _
    $region7: #{tpu_custom_call.1} parent=1 // pred_check_branch
      %11 = sbr.rel (0) target = $region9
    $region8: #{tpu_custom_call.1} parent=1 // pred_region
      _
    $region9: #{tpu_custom_call.1} parent=1 // pred_fallthru
      _
    %v12 = vld [vmem:[%s0] sm:$0xff]
    %v13 = vld [vmem:[%s0 + $0x8] sm:$0xff]
    %v14 = vlaneseq
    %v15 = vand.u32 %v14, 127
    %v16 = vld [vmem:[%s1] sm:$0xff]
    %v17 = vld [vmem:[%s1 + $0x8] sm:$0xff]
    %v18 = vld [vmem:[%s1 + $0x10] sm:$0xff]
    %v19 = vld [vmem:[%s1 + $0x18] sm:$0xff]
    %v20 = vld [vmem:[%s1 + $0x20] sm:$0xff]
    %v21 = vld [vmem:[%s1 + $0x28] sm:$0xff]
    %v22 = vld [vmem:[%s1 + $0x30] sm:$0xff]
    %v23 = vld [vmem:[%s1 + $0x38] sm:$0xff]
    %24 = vset.pattern.permute.xlu0 0
    %25 = vperm.xlu0 %24, %v12
    %v26 = vpop.permute.xlu0 %25
    %27 = vset.pattern.permute.xlu0 0
    %28 = vperm.xlu0 %27, %v13
    %v29 = vpop.permute.xlu0 %28
    %vm30 = vcmp.eq.s32.totalorder %v15, %v26
    %vm31 = vcmp.eq.s32.totalorder %v15, %v29
    %v32 = vsel %vm30, 5.656854, 0.0
    %v33 = vsel %vm31, 5.656854, 0.0
    %vm34 = vcmask 523264
    %v36 = vsel %vm34, %v32, 0
    %v39 = vsel %vm34, %v33, 0
    %41 = vmatprep.subr.mxu0 0.0
    %42 = vmatpush1.msra.mxu0 %v16
    %43 = vmatprep.subr.mxu0 0.0
    %44 = vmatpush1.msra.mxu0 %v17
    %45 = vmatprep.subr.mxu0 0.0
    %46 = vmatpush1.msra.mxu0 %v18
    %47 = vmatprep.subr.mxu0 0.0
    %48 = vmatpush1.msra.mxu0 %v19
    %49 = vmatprep.subr.mxu0 0.0
    %50 = vmatpush1.msra.mxu0 %v20
    %51 = vmatprep.subr.mxu0 0.0
    %52 = vmatpush1.msra.mxu0 %v21
    %53 = vmatprep.subr.mxu0 0.0
    %54 = vmatpush1.msra.mxu0 %v22
    %55 = vmatprep.subr.mxu0 0.0
    %56 = vmatpush1.msra.mxu0 %v23
    %57 = vmatprep.subr.mxu0 0.0
    %58 = vmatpush1.msra.mxu0 0.0
    %59 = vmatprep.subr.mxu0 0.0
    %60 = vmatpush1.msra.mxu0 0.0
    %61 = vmatprep.subr.mxu0 0.0
    %62 = vmatpush1.msra.mxu0 0.0
    %63 = vmatprep.subr.mxu0 0.0
    %64 = vmatpush1.msra.mxu0 0.0
    %65 = vmatprep.subr.mxu0 0.0
    %66 = vmatpush1.msra.mxu0 0.0
    %67 = vmatprep.subr.mxu0 0.0
    %68 = vmatpush1.msra.mxu0 0.0
    %69 = vmatprep.subr.mxu0 0.0
    %70 = vmatpush1.msra.mxu0 0.0
    %71 = vmatprep.subr.mxu0 0.0
    %72 = vmatpush1.msra.mxu0 0.0
    %73 = vmatprep.subr.mxu0 0.0
    %74 = vmatpush1.msra.mxu0 0.0
    %75 = vmatprep.subr.mxu0 0.0
    %76 = vmatpush1.msra.mxu0 0.0
    %77 = vmatprep.subr.mxu0 0.0
    %78 = vmatpush1.msra.mxu0 0.0
    %79 = vmatprep.subr.mxu0 0.0
    %80 = vmatpush1.msra.mxu0 0.0
    %81 = vmatprep.subr.mxu0 0.0
    %82 = vmatpush1.msra.mxu0 0.0
    %83 = vmatprep.subr.mxu0 0.0
    %84 = vmatpush1.msra.mxu0 0.0
    %85 = vmatprep.subr.mxu0 0.0
    %86 = vmatpush1.msra.mxu0 0.0
    %87 = vmatprep.subr.mxu0 0.0
    %88 = vmatpush1.msra.mxu0 0.0
    %89 = vmatprep.subr.mxu0 0.0
    %90 = vmatpush1.msra.mxu0 0.0
    %91 = vmatprep.subr.mxu0 0.0
    %92 = vmatpush1.msra.mxu0 0.0
    %93 = vmatprep.subr.mxu0 0.0
    %94 = vmatpush1.msra.mxu0 0.0
    %95 = vmatprep.subr.mxu0 0.0
    %96 = vmatpush1.msra.mxu0 0.0
    %97 = vmatprep.subr.mxu0 0.0
    %98 = vmatpush1.msra.mxu0 0.0
    %99 = vmatprep.subr.mxu0 0.0
    %100 = vmatpush1.msra.mxu0 0.0
    %101 = vmatprep.subr.mxu0 0.0
    %102 = vmatpush1.msra.mxu0 0.0
    %103 = vmatprep.subr.mxu0 0.0
    %104 = vmatpush1.msra.mxu0 0.0
    %105 = vmatprep.mubr.f32.mxu0 0.0
    %106 = vmatmul.mubr.f32.gmra.mrb[0].mxu0 %v36
    %v107 = vpop.f32.mrb[0].mxu0
    %v108 = vadd.f32 0.0, %v107
    %v109 = vpop.f32.mrb[0].mxu0
    %110 = vmatprep.mubr.f32.mxu0 0.0
    %111 = vmatmul.mubr.f32.gmra.mrb[0].mxu0 %v39
    %v112 = vpop.f32.mrb[0].mxu0
    %v113 = vadd.f32 0.0, %v112
    %v114 = vpop.f32.mrb[0].mxu0
    %115 = vdwg.mxu0
    %vm116 = vcmask 261120
    %117 = vst.msk [vmem:[#allocation2] sm:$0xff] %vm116, %v108
    %118 = vst.msk [vmem:[#allocation2 + $0x8] sm:$0xff] %vm116, %v113
    // Predicated region
    $region10: #{tpu_custom_call.1} parent=1 // pred_check
      _
    $region11: #{tpu_custom_call.1} parent=1 // pred_check_branch
      %120 = sbr.rel (0) target = $region13
    $region12: #{tpu_custom_call.1} parent=1 // pred_region
      %s122 = ssub.s32 256, 256
      %123 = vsyncadd [#allocation3], %s122
      %s124 = sshll.u32 [#allocation2], 4
      %s125 = int_to_ptr.vmem [resolvable:$true] %s124
      %130 = dma.vmem_to_hbm [thread:$0]  %s125, 256, %s2, [#allocation3], 128, 128, 8
    $region13: #{tpu_custom_call.1} parent=1 // pred_fallthru
      _
    // Predicated region
    $region14: #{tpu_custom_call.1} parent=1 // pred_check
      _
    $region15: #{tpu_custom_call.1} parent=1 // pred_check_branch
      %132 = sbr.rel (0) target = $region17
    $region16: #{tpu_custom_call.1} parent=1 // pred_region
      %133 = dma.done [#allocation3], 256
    $region17: #{tpu_custom_call.1} parent=1 // pred_fallthru
      _
    %134 = vsyncpa [#allocation3], 1

</llo_original>
